<compile_context>
chip_gen: v5e
topology: v5e:2x2
jax: 0.10.0
libtpu: 0.0.40
codegen_flags: <defaults>
</compile_context>

<pallas_src>
import functools

import jax
import jax.numpy as jnp
from jax.experimental import pallas as pl
from jax.experimental.pallas import tpu as pltpu

_TILE_N_MAX = 8192  # rows per grid step (multiple of 128); fits v5e scoped VMEM


def _discriminator_kernel(x_ref, w1_ref, w2_ref, w3_ref, w4_ref, w5_ref, o_ref):
    """Fused feature-major MLP tile, bias-folded, all layers on the MXU.

    x_ref : (3,  T)   [feat0; feat1; ones], batch on the 128-lane axis
    w1    : (51, 3)   augmented
    w2..4 : (51, 51)  augmented
    w5    : (8,  51)  row 0 = [w5 | b5], rows 1..7 zero
    o_ref : (1,  T)   lane-dense sigmoid output
    """
    def leaky_relu(v):
        # max(v, 0.2*v): 2 VALU ops per vreg (vs 3 for cmp + mul + select).
        return jnp.maximum(v, 0.2 * v)

    f32 = jnp.float32

    # Layer 1 (augmented, K=3) -> (51, T).  Row 50 carries the ones feature.
    h = leaky_relu(jnp.dot(w1_ref[...], x_ref[...], preferred_element_type=f32))
    # Layers 2-4 (augmented 51x51) -> (51, T), f32 accumulation on the MXU.
    h = leaky_relu(jnp.dot(w2_ref[...], h, preferred_element_type=f32))
    h = leaky_relu(jnp.dot(w3_ref[...], h, preferred_element_type=f32))
    h = leaky_relu(jnp.dot(w4_ref[...], h, preferred_element_type=f32))
    # Layer 5 on the MXU; only row 0 of the (8, T) result is meaningful.
    z = jnp.dot(w5_ref[...], h, preferred_element_type=f32)[0:1, :]     # (1, T)

    # Numerically-stable sigmoid: exp(-|z|) never overflows.
    e = jnp.exp(-jnp.abs(z))                                            # EUP
    o_ref[...] = jnp.where(z >= 0, 1.0 / (1.0 + e), e / (1.0 + e))


def _round_up(v, m):
    return ((v + m - 1) // m) * m


def _pick_tiles(n):
    n128 = _round_up(max(n, 1), 128)
    # >= 2 grid steps whenever possible (v7x megacore: "parallel" only helps
    # with >= 2 steps to shard across its two TensorCores); cap the tile so a
    # few live (56, T) f32 activations fit v5e's 16 MiB scoped VMEM.
    tile_n = min(_TILE_N_MAX, max(128, _round_up(n128 // 2, 128)))
    n_pad = _round_up(n128, tile_n)
    return tile_n, n_pad


def init_params(key):
    """PyTorch nn.Linear-style init: W (out, in), b (out,), U(+-1/sqrt(fan_in))."""
    dims = [(2, 50), (50, 50), (50, 50), (50, 50), (50, 1)]
    params = []
    for fan_in, fan_out in dims:
        key, kw, kb = jax.random.split(key, 3)
        bound = 1.0 / float(fan_in) ** 0.5
        w = jax.random.uniform(kw, (fan_out, fan_in), jnp.float32, -bound, bound)
        b = jax.random.uniform(kb, (fan_out,), jnp.float32, -bound, bound)
        params.append((w, b))
    return params


def _augment_params(params):
    """Fold biases into the weights via the ones-feature trick (done once)."""
    (w1, b1), (w2, b2), (w3, b3), (w4, b4), (w5, b5) = params

    def aug_hidden(w, b):
        top = jnp.concatenate([w, b.reshape(-1, 1)], axis=1)            # (out, in+1)
        bot = jnp.concatenate(
            [jnp.zeros((1, w.shape[1]), w.dtype), jnp.ones((1, 1), w.dtype)],
            axis=1)                                                     # carry row
        return jnp.concatenate([top, bot], axis=0)                      # (out+1, in+1)

    w1a = aug_hidden(w1, b1)                                            # (51, 3)
    w2a = aug_hidden(w2, b2)                                            # (51, 51)
    w3a = aug_hidden(w3, b3)
    w4a = aug_hidden(w4, b4)
    w5row = jnp.concatenate([w5, b5.reshape(1, 1)], axis=1)             # (1, 51)
    w5a = jnp.concatenate([w5row, jnp.zeros((7, 51), w5.dtype)], axis=0)  # (8, 51)
    return [w1a, w2a, w3a, w4a, w5a]


@jax.jit
def discriminator_forward(x, params):
    """x: (N, 2) float32  ->  (N,) float32 probabilities."""
    n = x.shape[0]
    tile_n, n_pad = _pick_tiles(n)

    # Feature-major augmented input: (3, N_pad) = [x^T ; ones], zero-padded.
    x_f = x.astype(jnp.float32)
    x_aug = jnp.concatenate([x_f, jnp.ones((n, 1), jnp.float32)], axis=1).T
    x_aug = jnp.pad(x_aug, ((0, 0), (0, n_pad - n)))

    kweights = _augment_params(params)

    flat_args = [x_aug]
    in_specs = [pl.BlockSpec((3, tile_n), lambda i: (0, i))]
    param_bytes = 0
    for w in kweights:
        flat_args.append(w)
        # Constant index maps: weights stay VMEM-resident across grid steps.
        in_specs.append(pl.BlockSpec(w.shape, lambda i: (0, 0)))
        param_bytes += 4 * w.size

    cost = pl.CostEstimate(
        flops=2 * n_pad * (51 * 3 + 3 * 51 * 51 + 8 * 51),
        transcendentals=n_pad,
        bytes_accessed=16 * n_pad + param_bytes,
    )

    out = pl.pallas_call(
        _discriminator_kernel,
        out_shape=jax.ShapeDtypeStruct((1, n_pad), jnp.float32),
        grid=(n_pad // tile_n,),
        in_specs=in_specs,
        out_specs=pl.BlockSpec((1, tile_n), lambda i: (0, i)),
        compiler_params=pltpu.CompilerParams(
            dimension_semantics=("parallel",)),
        cost_estimate=cost,
    )(*flat_args)

    return out[0, :n]   # glue: matches torch .reshape(-1)


def discriminator_ref(x, params):
    """Pure-JAX reference (PyTorch semantics: h @ W.T + b)."""
    h = x
    for i, (w, b) in enumerate(params):
        h = h @ w.T + b
        if i < len(params) - 1:
            h = jnp.where(h > 0, h, 0.2 * h)
    return jax.nn.sigmoid(h).reshape(-1)


if __name__ == "__main__":
    key = jax.random.PRNGKey(0)
    key, kx1, kx2 = jax.random.split(key, 3)
    params = init_params(key)

    # Small toy-ring batches (points in R^2); the second case exercises the
    # padding / multi-tile (>= 2 grid steps) path.
    for batch, kx in ((8, kx1), (300, kx2)):
        x = jax.random.normal(kx, (batch, 2), jnp.float32)
        out = jax.block_until_ready(discriminator_forward(x, params))
        ref = discriminator_ref(x, params)
        assert out.shape == (batch,)
        # Tolerance covers TPU default (reduced-precision) matmul lowering plus
        # the bias-folding numerics change (review: "tolerances must be
        # updated accordingly"); outputs are sigmoid probabilities in [0, 1].
        err = float(jnp.max(jnp.abs(out - ref)))
        assert jnp.allclose(out, ref, atol=2e-3, rtol=1e-3), err

    print("KERNEL_OK")
</pallas_src>

<mosaic_0001>
module attributes {stable_mosaic.version = 11 : i64} {
  func.func @_discriminator_kernel(%arg0: i32, %arg1: memref<3x128xf32, #tpu.memory_space<vmem>>, %arg2: memref<51x3xf32, #tpu.memory_space<vmem>>, %arg3: memref<51x51xf32, #tpu.memory_space<vmem>>, %arg4: memref<51x51xf32, #tpu.memory_space<vmem>>, %arg5: memref<51x51xf32, #tpu.memory_space<vmem>>, %arg6: memref<8x51xf32, #tpu.memory_space<vmem>>, %arg7: memref<1x128xf32, #tpu.memory_space<vmem>>) attributes {dimension_semantics = [#tpu.dimension_semantics<parallel>], iteration_bounds = array<i64: 1>, scalar_prefetch = 0 : i64, scratch_operands = 0 : i64, tpu.core_type = #tpu.core_type<tc>, window_params = [{transform_indices = @transform_0, window_bounds = array<i64: 3, 128>}, {pipeline_mode = #tpu.pipeline_mode<synchronous>, transform_indices = @transform_1, window_bounds = array<i64: 51, 3>}, {pipeline_mode = #tpu.pipeline_mode<synchronous>, transform_indices = @transform_2, window_bounds = array<i64: 51, 51>}, {pipeline_mode = #tpu.pipeline_mode<synchronous>, transform_indices = @transform_3, window_bounds = array<i64: 51, 51>}, {pipeline_mode = #tpu.pipeline_mode<synchronous>, transform_indices = @transform_4, window_bounds = array<i64: 51, 51>}, {pipeline_mode = #tpu.pipeline_mode<synchronous>, transform_indices = @transform_5, window_bounds = array<i64: 8, 51>}, {transform_indices = @transform_6, window_bounds = array<i64: 1, 128>}]} {
    %c0 = arith.constant 0 : index
    %c0_0 = arith.constant 0 : index
    %0 = vector.load %arg2[%c0, %c0_0] : memref<51x3xf32, #tpu.memory_space<vmem>>, vector<51x3xf32>
    %c0_1 = arith.constant 0 : index
    %c0_2 = arith.constant 0 : index
    %1 = vector.load %arg1[%c0_1, %c0_2] : memref<3x128xf32, #tpu.memory_space<vmem>>, vector<3x128xf32>
    %cst = arith.constant dense<0.000000e+00> : vector<51x128xf32>
    %2 = tpu.matmul %0, %1, %cst {dimension_numbers = #tpu.dot_dimension_numbers<[1], [0], [0], [1], [0, 0, 1, 1], [], []>} : vector<51x3xf32>, vector<3x128xf32>, vector<51x128xf32> -> vector<51x128xf32>
    %cst_3 = arith.constant 2.000000e-01 : f32
    %3 = vector.broadcast %cst_3 : f32 to vector<51x128xf32>
    %4 = arith.mulf %3, %2 : vector<51x128xf32>
    %5 = arith.maximumf %2, %4 : vector<51x128xf32>
    %c0_4 = arith.constant 0 : index
    %c0_5 = arith.constant 0 : index
    %6 = vector.load %arg3[%c0_4, %c0_5] : memref<51x51xf32, #tpu.memory_space<vmem>>, vector<51x51xf32>
    %cst_6 = arith.constant dense<0.000000e+00> : vector<51x128xf32>
    %7 = tpu.matmul %6, %5, %cst_6 {dimension_numbers = #tpu.dot_dimension_numbers<[1], [0], [0], [1], [0, 0, 1, 1], [], []>} : vector<51x51xf32>, vector<51x128xf32>, vector<51x128xf32> -> vector<51x128xf32>
    %cst_7 = arith.constant 2.000000e-01 : f32
    %8 = vector.broadcast %cst_7 : f32 to vector<51x128xf32>
    %9 = arith.mulf %8, %7 : vector<51x128xf32>
    %10 = arith.maximumf %7, %9 : vector<51x128xf32>
    %c0_8 = arith.constant 0 : index
    %c0_9 = arith.constant 0 : index
    %11 = vector.load %arg4[%c0_8, %c0_9] : memref<51x51xf32, #tpu.memory_space<vmem>>, vector<51x51xf32>
    %cst_10 = arith.constant dense<0.000000e+00> : vector<51x128xf32>
    %12 = tpu.matmul %11, %10, %cst_10 {dimension_numbers = #tpu.dot_dimension_numbers<[1], [0], [0], [1], [0, 0, 1, 1], [], []>} : vector<51x51xf32>, vector<51x128xf32>, vector<51x128xf32> -> vector<51x128xf32>
    %cst_11 = arith.constant 2.000000e-01 : f32
    %13 = vector.broadcast %cst_11 : f32 to vector<51x128xf32>
    %14 = arith.mulf %13, %12 : vector<51x128xf32>
    %15 = arith.maximumf %12, %14 : vector<51x128xf32>
    %c0_12 = arith.constant 0 : index
    %c0_13 = arith.constant 0 : index
    %16 = vector.load %arg5[%c0_12, %c0_13] : memref<51x51xf32, #tpu.memory_space<vmem>>, vector<51x51xf32>
    %cst_14 = arith.constant dense<0.000000e+00> : vector<51x128xf32>
    %17 = tpu.matmul %16, %15, %cst_14 {dimension_numbers = #tpu.dot_dimension_numbers<[1], [0], [0], [1], [0, 0, 1, 1], [], []>} : vector<51x51xf32>, vector<51x128xf32>, vector<51x128xf32> -> vector<51x128xf32>
    %cst_15 = arith.constant 2.000000e-01 : f32
    %18 = vector.broadcast %cst_15 : f32 to vector<51x128xf32>
    %19 = arith.mulf %18, %17 : vector<51x128xf32>
    %20 = arith.maximumf %17, %19 : vector<51x128xf32>
    %c0_16 = arith.constant 0 : index
    %c0_17 = arith.constant 0 : index
    %21 = vector.load %arg6[%c0_16, %c0_17] : memref<8x51xf32, #tpu.memory_space<vmem>>, vector<8x51xf32>
    %cst_18 = arith.constant dense<0.000000e+00> : vector<8x128xf32>
    %22 = tpu.matmul %21, %20, %cst_18 {dimension_numbers = #tpu.dot_dimension_numbers<[1], [0], [0], [1], [0, 0, 1, 1], [], []>} : vector<8x51xf32>, vector<51x128xf32>, vector<8x128xf32> -> vector<8x128xf32>
    %23 = vector.extract_strided_slice %22 {offsets = [0, 0], sizes = [1, 128], strides = [1, 1]} : vector<8x128xf32> to vector<1x128xf32>
    %24 = math.absf %23 : vector<1x128xf32>
    %cst_19 = arith.constant 0.000000e+00 : f32
    %25 = vector.broadcast %cst_19 : f32 to vector<1x128xf32>
    %26 = arith.subf %25, %24 : vector<1x128xf32>
    %27 = math.exp %26 : vector<1x128xf32>
    %cst_20 = arith.constant 0.000000e+00 : f32
    %28 = vector.broadcast %cst_20 : f32 to vector<1x128xf32>
    %29 = arith.cmpf oge, %23, %28 : vector<1x128xf32>
    %cst_21 = arith.constant 1.000000e+00 : f32
    %30 = vector.broadcast %cst_21 : f32 to vector<1x128xf32>
    %31 = arith.addf %30, %27 : vector<1x128xf32>
    %cst_22 = arith.constant 1.000000e+00 : f32
    %32 = vector.broadcast %cst_22 : f32 to vector<1x128xf32>
    %33 = arith.divf %32, %31 : vector<1x128xf32>
    %cst_23 = arith.constant 1.000000e+00 : f32
    %34 = vector.broadcast %cst_23 : f32 to vector<1x128xf32>
    %35 = arith.addf %34, %27 : vector<1x128xf32>
    %36 = arith.divf %27, %35 : vector<1x128xf32>
    %37 = arith.select %29, %33, %36 : vector<1x128xi1>, vector<1x128xf32>
    %c0_24 = arith.constant 0 : index
    %c0_25 = arith.constant 0 : index
    %38 = vector.load %arg7[%c0_24, %c0_25] : memref<1x128xf32, #tpu.memory_space<vmem>>, vector<1x128xf32>
    tpu.vector_store %arg7[%c0_24, %c0_25], %37 {strides = array<i32>} : memref<1x128xf32, #tpu.memory_space<vmem>>, vector<1x128xf32>,
    return
  }
  func.func @transform_0(%arg0: i32) -> (i32, i32) {
    %c0_i32 = arith.constant 0 : i32
    %c0_i32_0 = arith.constant 0 : i32
    return %c0_i32, %arg0 : i32, i32
  }
  func.func @transform_1(%arg0: i32) -> (i32, i32) {
    %c0_i32 = arith.constant 0 : i32
    %c0_i32_0 = arith.constant 0 : i32
    %c0_i32_1 = arith.constant 0 : i32
    return %c0_i32, %c0_i32_0 : i32, i32
  }
  func.func @transform_2(%arg0: i32) -> (i32, i32) {
    %c0_i32 = arith.constant 0 : i32
    %c0_i32_0 = arith.constant 0 : i32
    %c0_i32_1 = arith.constant 0 : i32
    return %c0_i32, %c0_i32_0 : i32, i32
  }
  func.func @transform_3(%arg0: i32) -> (i32, i32) {
    %c0_i32 = arith.constant 0 : i32
    %c0_i32_0 = arith.constant 0 : i32
    %c0_i32_1 = arith.constant 0 : i32
    return %c0_i32, %c0_i32_0 : i32, i32
  }
  func.func @transform_4(%arg0: i32) -> (i32, i32) {
    %c0_i32 = arith.constant 0 : i32
    %c0_i32_0 = arith.constant 0 : i32
    %c0_i32_1 = arith.constant 0 : i32
    return %c0_i32, %c0_i32_0 : i32, i32
  }
  func.func @transform_5(%arg0: i32) -> (i32, i32) {
    %c0_i32 = arith.constant 0 : i32
    %c0_i32_0 = arith.constant 0 : i32
    %c0_i32_1 = arith.constant 0 : i32
    return %c0_i32, %c0_i32_0 : i32, i32
  }
  func.func @transform_6(%arg0: i32) -> (i32, i32) {
    %c0_i32 = arith.constant 0 : i32
    %c0_i32_0 = arith.constant 0 : i32
    return %c0_i32, %arg0 : i32, i32
  }
}

</mosaic_0001>

<llo_original>
// kernel: discriminator_forward.1
$region0: #{discriminator_forward.1}
  #allocation0 [shape = 'u32[]', space=smem, size = 0x4, offset = 0x4, fixed_abs, tag = 'smem constant byte address 0x4 - core index']
  #allocation1 [shape = 'u32[72,128]{1,0:T(1,128)}', space=vmem, size = 0x9000, scoped, tag = 'internal scratch']
  %s0 = inlined_call_operand.vmem [shape: f32[3,128], index: 0, kind: input, shape index: {}]
  %s1 = inlined_call_operand.vmem [shape: f32[51,3], index: 1, kind: input, shape index: {}]
  %s2 = inlined_call_operand.vmem [shape: f32[51,51], index: 2, kind: input, shape index: {}]
  %s3 = inlined_call_operand.vmem [shape: f32[51,51], index: 3, kind: input, shape index: {}]
  %s4 = inlined_call_operand.vmem [shape: f32[51,51], index: 4, kind: input, shape index: {}]
  %s5 = inlined_call_operand.vmem [shape: f32[8,51], index: 5, kind: input, shape index: {}]
  %s6 = inlined_call_operand.vmem [shape: f32[1,128], index: 6, kind: output, shape index: {}]
  %s7 = sld [smem:[#allocation0]]
  $region34: #{discriminator_forward.1} parent=0
    _
  %s9 = ssub.s32 1, %s7
  %s10 = scalar_select 0, %s9, %s7
  // Predicated region
  $region2: #{discriminator_forward.1} parent=0 // pred_check
    _
  $region3: #{discriminator_forward.1} parent=0 // pred_check_branch
    %12 = sbr.rel (0) target = $region5
  $region4: #{discriminator_forward.1} parent=0 // pred_region
    _
  $region5: #{discriminator_forward.1} parent=0 // pred_fallthru
    _
  // Predicated region
  $region6: #{discriminator_forward.1} parent=0 // pred_check
    _
  $region7: #{discriminator_forward.1} parent=0 // pred_check_branch
    %14 = sbr.rel (0) target = $region9
  $region8: #{discriminator_forward.1} parent=0 // pred_region
    _
  $region9: #{discriminator_forward.1} parent=0 // pred_fallthru
    _
  // Predicated region
  $region10: #{discriminator_forward.1} parent=0 // pred_check
    _
  $region11: #{discriminator_forward.1} parent=0 // pred_check_branch
    %16 = sbr.rel (0) target = $region13
  $region12: #{discriminator_forward.1} parent=0 // pred_region
    _
  $region13: #{discriminator_forward.1} parent=0 // pred_fallthru
    _
  // Predicated region
  $region14: #{discriminator_forward.1} parent=0 // pred_check
    _
  $region15: #{discriminator_forward.1} parent=0 // pred_check_branch
    %18 = sbr.rel (0) target = $region17
  $region16: #{discriminator_forward.1} parent=0 // pred_region
    _
  $region17: #{discriminator_forward.1} parent=0 // pred_fallthru
    _
  // Predicated region
  $region18: #{discriminator_forward.1} parent=0 // pred_check
    _
  $region19: #{discriminator_forward.1} parent=0 // pred_check_branch
    %20 = sbr.rel (0) target = $region21
  $region20: #{discriminator_forward.1} parent=0 // pred_region
    _
  $region21: #{discriminator_forward.1} parent=0 // pred_fallthru
    _
  // Predicated region
  $region22: #{discriminator_forward.1} parent=0 // pred_check
    _
  $region23: #{discriminator_forward.1} parent=0 // pred_check_branch
    %22 = sbr.rel (0) target = $region25
  $region24: #{discriminator_forward.1} parent=0 // pred_region
    _
  $region25: #{discriminator_forward.1} parent=0 // pred_fallthru
    _
  %v23 = vld [vmem:[%s1] sm:$0xff]
  %v24 = vld [vmem:[%s1 + $0x8] sm:$0xff]
  %v25 = vld [vmem:[%s1 + $0x10] sm:$0xff]
  %v26 = vld [vmem:[%s1 + $0x18] sm:$0xff]
  %v27 = vld [vmem:[%s1 + $0x20] sm:$0xff]
  %v28 = vld [vmem:[%s1 + $0x28] sm:$0xff]
  %v29 = vld [vmem:[%s1 + $0x30] sm:$0x7]
  %v30 = vld [vmem:[%s0] sm:$0x7]
  %vm31 = vcmask 23552
  %v33 = vsel %vm31, %v23, 0
  %v36 = vsel %vm31, %v24, 0
  %v39 = vsel %vm31, %v25, 0
  %v42 = vsel %vm31, %v26, 0
  %v45 = vsel %vm31, %v27, 0
  %v48 = vsel %vm31, %v28, 0
  %v51 = vsel %vm31, %v29, 0
  %vm53 = vcmask 1042432
  %v55 = vsel %vm53, %v30, 0
  %57 = vmatpush.msra.mxu0 0.0
  %58 = vmatpush.msra.mxu0 0.0
  %59 = vmatpush.msra.mxu0 0.0
  %60 = vmatpush.msra.mxu0 0.0
  %61 = vmatpush.msra.mxu0 0.0
  %62 = vmatpush.msra.mxu0 0.0
  %63 = vmatpush.msra.mxu0 0.0
  %64 = vmatpush.msra.mxu0 0.0
  %65 = vmatpush.msra.mxu0 0.0
  %66 = vmatpush.msra.mxu0 0.0
  %67 = vmatpush.msra.mxu0 0.0
  %68 = vmatpush.msra.mxu0 0.0
  %69 = vmatpush.msra.mxu0 0.0
  %70 = vmatpush.msra.mxu0 0.0
  %71 = vmatpush.msra.mxu0 0.0
  %72 = vmatpush.msra.mxu0 %v55
  %73 = vmatmul.f32.gmra.mxu0 %v33
  %v74 = vpop.f32.mrf.mxu0
  %v75 = vadd.f32 0.0, %v74
  %76 = vmatmul.f32.gmra.mxu0 %v36
  %v77 = vpop.f32.mrf.mxu0
  %v78 = vadd.f32 0.0, %v77
  %79 = vmatmul.f32.gmra.mxu0 %v39
  %v80 = vpop.f32.mrf.mxu0
  %v81 = vadd.f32 0.0, %v80
  %82 = vmatmul.f32.gmra.mxu0 %v42
  %v83 = vpop.f32.mrf.mxu0
  %v84 = vadd.f32 0.0, %v83
  %85 = vmatmul.f32.gmra.mxu0 %v45
  %v86 = vpop.f32.mrf.mxu0
  %v87 = vadd.f32 0.0, %v86
  %88 = vmatmul.f32.gmra.mxu0 %v48
  %v89 = vpop.f32.mrf.mxu0
  %v90 = vadd.f32 0.0, %v89
  %91 = vmatmul.f32.gmra.mxu0 %v51
  %v92 = vpop.f32.mrf.mxu0
  %v93 = vadd.f32 0.0, %v92
  %94 = vdwg.mxu0
  %v95 = vmul.f32 %v75, 0.2
  %v96 = vmul.f32 %v78, 0.2
  %v97 = vmul.f32 %v81, 0.2
  %v98 = vmul.f32 %v84, 0.2
  %v99 = vmul.f32 %v87, 0.2
  %v100 = vmul.f32 %v90, 0.2
  %v101 = vmul.f32 %v93, 0.2
  %v102 = vmax.f32 %v75, %v95
  %v103 = vmax.f32 %v78, %v96
  %v104 = vmax.f32 %v81, %v97
  %v105 = vmax.f32 %v84, %v98
  %v106 = vmax.f32 %v87, %v99
  %v107 = vmax.f32 %v90, %v100
  %v108 = vmax.f32 %v93, %v101
  %v109 = vld [vmem:[%s2] sm:$0xff]
  %v110 = vld [vmem:[%s2 + $0x8] sm:$0xff]
  %v111 = vld [vmem:[%s2 + $0x10] sm:$0xff]
  %v112 = vld [vmem:[%s2 + $0x18] sm:$0xff]
  %v113 = vld [vmem:[%s2 + $0x20] sm:$0xff]
  %v114 = vld [vmem:[%s2 + $0x28] sm:$0xff]
  %v115 = vld [vmem:[%s2 + $0x30] sm:$0x7]
  %vm116 = vcmask 416768
  %v118 = vsel %vm116, %v109, 0
  %v121 = vsel %vm116, %v110, 0
  %v124 = vsel %vm116, %v111, 0
  %v127 = vsel %vm116, %v112, 0
  %v130 = vsel %vm116, %v113, 0
  %v133 = vsel %vm116, %v114, 0
  %v136 = vsel %vm116, %v115, 0
  %v139 = vsel %vm53, %v108, 0
  %141 = vmatpush.msra.mxu0 0.0
  %142 = vmatpush.msra.mxu0 0.0
  %143 = vmatpush.msra.mxu0 0.0
  %144 = vmatpush.msra.mxu0 0.0
  %145 = vmatpush.msra.mxu0 0.0
  %146 = vmatpush.msra.mxu0 0.0
  %147 = vmatpush.msra.mxu0 0.0
  %148 = vmatpush.msra.mxu0 0.0
  %149 = vmatpush.msra.mxu0 0.0
  %150 = vmatpush.msra.mxu0 %v139
  %151 = vmatpush.msra.mxu0 %v107
  %152 = vmatpush.msra.mxu0 %v106
  %153 = vmatpush.msra.mxu0 %v105
  %154 = vmatpush.msra.mxu0 %v104
  %155 = vmatpush.msra.mxu0 %v103
  %156 = vmatpush.msra.mxu0 %v102
  %157 = vmatmul.f32.gmra.mxu0 %v118
  %v158 = vpop.f32.mrf.mxu0
  %v159 = vadd.f32 0.0, %v158
  %160 = vmatmul.f32.gmra.mxu0 %v121
  %v161 = vpop.f32.mrf.mxu0
  %v162 = vadd.f32 0.0, %v161
  %163 = vmatmul.f32.gmra.mxu0 %v124
  %v164 = vpop.f32.mrf.mxu0
  %v165 = vadd.f32 0.0, %v164
  %166 = vmatmul.f32.gmra.mxu0 %v127
  %v167 = vpop.f32.mrf.mxu0
  %v168 = vadd.f32 0.0, %v167
  %169 = vmatmul.f32.gmra.mxu0 %v130
  %v170 = vpop.f32.mrf.mxu0
  %v171 = vadd.f32 0.0, %v170
  %172 = vmatmul.f32.gmra.mxu0 %v133
  %v173 = vpop.f32.mrf.mxu0
  %v174 = vadd.f32 0.0, %v173
  %175 = vmatmul.f32.gmra.mxu0 %v136
  %v176 = vpop.f32.mrf.mxu0
  %v177 = vadd.f32 0.0, %v176
  %178 = vdwg.mxu0
  %v179 = vmul.f32 %v159, 0.2
  %v180 = vmul.f32 %v162, 0.2
  %v181 = vmul.f32 %v165, 0.2
  %v182 = vmul.f32 %v168, 0.2
  %v183 = vmul.f32 %v171, 0.2
  %v184 = vmul.f32 %v174, 0.2
  %v185 = vmul.f32 %v177, 0.2
  %v186 = vmax.f32 %v159, %v179
  %v187 = vmax.f32 %v162, %v180
  %v188 = vmax.f32 %v165, %v181
  %v189 = vmax.f32 %v168, %v182
  %v190 = vmax.f32 %v171, %v183
  %v191 = vmax.f32 %v174, %v184
  %v192 = vmax.f32 %v177, %v185
  %v193 = vld [vmem:[%s3] sm:$0xff]
  %v194 = vld [vmem:[%s3 + $0x8] sm:$0xff]
  %v195 = vld [vmem:[%s3 + $0x10] sm:$0xff]
  %v196 = vld [vmem:[%s3 + $0x18] sm:$0xff]
  %v197 = vld [vmem:[%s3 + $0x20] sm:$0xff]
  %v198 = vld [vmem:[%s3 + $0x28] sm:$0xff]
  %v199 = vld [vmem:[%s3 + $0x30] sm:$0x7]
  %v201 = vsel %vm116, %v193, 0
  %v204 = vsel %vm116, %v194, 0
  %v207 = vsel %vm116, %v195, 0
  %v210 = vsel %vm116, %v196, 0
  %v213 = vsel %vm116, %v197, 0
  %v216 = vsel %vm116, %v198, 0
  %v219 = vsel %vm116, %v199, 0
  %v222 = vsel %vm53, %v192, 0
  %224 = vmatpush.msra.mxu0 0.0
  %225 = vmatpush.msra.mxu0 0.0
  %226 = vmatpush.msra.mxu0 0.0
  %227 = vmatpush.msra.mxu0 0.0
  %228 = vmatpush.msra.mxu0 0.0
  %229 = vmatpush.msra.mxu0 0.0
  %230 = vmatpush.msra.mxu0 0.0
  %231 = vmatpush.msra.mxu0 0.0
  %232 = vmatpush.msra.mxu0 0.0
  %233 = vmatpush.msra.mxu0 %v222
  %234 = vmatpush.msra.mxu0 %v191
  %235 = vmatpush.msra.mxu0 %v190
  %236 = vmatpush.msra.mxu0 %v189
  %237 = vmatpush.msra.mxu0 %v188
  %238 = vmatpush.msra.mxu0 %v187
  %239 = vmatpush.msra.mxu0 %v186
  %240 = vmatmul.f32.gmra.mxu0 %v201
  %v241 = vpop.f32.mrf.mxu0
  %v242 = vadd.f32 0.0, %v241
  %243 = vmatmul.f32.gmra.mxu0 %v204
  %v244 = vpop.f32.mrf.mxu0
  %v245 = vadd.f32 0.0, %v244
  %246 = vmatmul.f32.gmra.mxu0 %v207
  %v247 = vpop.f32.mrf.mxu0
  %v248 = vadd.f32 0.0, %v247
  %249 = vmatmul.f32.gmra.mxu0 %v210
  %v250 = vpop.f32.mrf.mxu0
  %v251 = vadd.f32 0.0, %v250
  %252 = vmatmul.f32.gmra.mxu0 %v213
  %v253 = vpop.f32.mrf.mxu0
  %v254 = vadd.f32 0.0, %v253
  %255 = vmatmul.f32.gmra.mxu0 %v216
  %v256 = vpop.f32.mrf.mxu0
  %v257 = vadd.f32 0.0, %v256
  %258 = vmatmul.f32.gmra.mxu0 %v219
  %v259 = vpop.f32.mrf.mxu0
  %v260 = vadd.f32 0.0, %v259
  %261 = vdwg.mxu0
  %v262 = vmul.f32 %v242, 0.2
  %v263 = vmul.f32 %v245, 0.2
  %v264 = vmul.f32 %v248, 0.2
  %v265 = vmul.f32 %v251, 0.2
  %v266 = vmul.f32 %v254, 0.2
  %v267 = vmul.f32 %v257, 0.2
  %v268 = vmul.f32 %v260, 0.2
  %v269 = vmax.f32 %v242, %v262
  %v270 = vmax.f32 %v245, %v263
  %v271 = vmax.f32 %v248, %v264
  %v272 = vmax.f32 %v251, %v265
  %v273 = vmax.f32 %v254, %v266
  %v274 = vmax.f32 %v257, %v267
  %v275 = vmax.f32 %v260, %v268
  %v276 = vld [vmem:[%s4] sm:$0xff]
  %v277 = vld [vmem:[%s4 + $0x8] sm:$0xff]
  %v278 = vld [vmem:[%s4 + $0x10] sm:$0xff]
  %v279 = vld [vmem:[%s4 + $0x18] sm:$0xff]
  %v280 = vld [vmem:[%s4 + $0x20] sm:$0xff]
  %v281 = vld [vmem:[%s4 + $0x28] sm:$0xff]
  %v282 = vld [vmem:[%s4 + $0x30] sm:$0x7]
  %v284 = vsel %vm116, %v276, 0
  %v287 = vsel %vm116, %v277, 0
  %v290 = vsel %vm116, %v278, 0
  %v293 = vsel %vm116, %v279, 0
  %v296 = vsel %vm116, %v280, 0
  %v299 = vsel %vm116, %v281, 0
  %v302 = vsel %vm116, %v282, 0
  %v305 = vsel %vm53, %v275, 0
  %307 = vmatpush.msra.mxu0 0.0
  %308 = vmatpush.msra.mxu0 0.0
  %309 = vmatpush.msra.mxu0 0.0
  %310 = vmatpush.msra.mxu0 0.0
  %311 = vmatpush.msra.mxu0 0.0
  %312 = vmatpush.msra.mxu0 0.0
  %313 = vmatpush.msra.mxu0 0.0
  %314 = vmatpush.msra.mxu0 0.0
  %315 = vmatpush.msra.mxu0 0.0
  %316 = vmatpush.msra.mxu0 %v305
  %317 = vmatpush.msra.mxu0 %v274
  %318 = vmatpush.msra.mxu0 %v273
  %319 = vmatpush.msra.mxu0 %v272
  %320 = vmatpush.msra.mxu0 %v271
  %321 = vmatpush.msra.mxu0 %v270
  %322 = vmatpush.msra.mxu0 %v269
  %323 = vmatmul.f32.gmra.mxu0 %v284
  %v324 = vpop.f32.mrf.mxu0
  %v325 = vadd.f32 0.0, %v324
  %326 = vmatmul.f32.gmra.mxu0 %v287
  %v327 = vpop.f32.mrf.mxu0
  %v328 = vadd.f32 0.0, %v327
  %329 = vmatmul.f32.gmra.mxu0 %v290
  %v330 = vpop.f32.mrf.mxu0
  %v331 = vadd.f32 0.0, %v330
  %332 = vmatmul.f32.gmra.mxu0 %v293
  %v333 = vpop.f32.mrf.mxu0
  %v334 = vadd.f32 0.0, %v333
  %335 = vmatmul.f32.gmra.mxu0 %v296
  %v336 = vpop.f32.mrf.mxu0
  %v337 = vadd.f32 0.0, %v336
  %338 = vmatmul.f32.gmra.mxu0 %v299
  %v339 = vpop.f32.mrf.mxu0
  %v340 = vadd.f32 0.0, %v339
  %341 = vmatmul.f32.gmra.mxu0 %v302
  %v342 = vpop.f32.mrf.mxu0
  %v343 = vadd.f32 0.0, %v342
  %344 = vdwg.mxu0
  %v345 = vmul.f32 %v325, 0.2
  %v346 = vmul.f32 %v328, 0.2
  %v347 = vmul.f32 %v331, 0.2
  %v348 = vmul.f32 %v334, 0.2
  %v349 = vmul.f32 %v337, 0.2
  %v350 = vmul.f32 %v340, 0.2
  %v351 = vmul.f32 %v343, 0.2
  %v352 = vmax.f32 %v325, %v345
  %v353 = vmax.f32 %v328, %v346
  %v354 = vmax.f32 %v331, %v347
  %v355 = vmax.f32 %v334, %v348
  %v356 = vmax.f32 %v337, %v349
  %v357 = vmax.f32 %v340, %v350
  %v358 = vmax.f32 %v343, %v351
  %v359 = vld [vmem:[%s5] sm:$0xff]
  %v361 = vsel %vm116, %v359, 0
  %v364 = vsel %vm53, %v358, 0
  %366 = vmatpush.msra.mxu0 0.0
  %367 = vmatpush.msra.mxu0 0.0
  %368 = vmatpush.msra.mxu0 0.0
  %369 = vmatpush.msra.mxu0 0.0
  %370 = vmatpush.msra.mxu0 0.0
  %371 = vmatpush.msra.mxu0 0.0
  %372 = vmatpush.msra.mxu0 0.0
  %373 = vmatpush.msra.mxu0 0.0
  %374 = vmatpush.msra.mxu0 0.0
  %375 = vmatpush.msra.mxu0 %v364
  %376 = vmatpush.msra.mxu0 %v357
  %377 = vmatpush.msra.mxu0 %v356
  %378 = vmatpush.msra.mxu0 %v355
  %379 = vmatpush.msra.mxu0 %v354
  %380 = vmatpush.msra.mxu0 %v353
  %381 = vmatpush.msra.mxu0 %v352
  %382 = vmatmul.f32.gmra.mxu0 %v361
  %v383 = vpop.f32.mrf.mxu0
  %v384 = vadd.f32 0.0, %v383
  %385 = vdwg.mxu0
  %v386 = vand.u32 2147483647, %v384
  %v387 = vsub.f32 0.0, %v386
  %v388 = vmul.f32 %v387, 1.442695
  %v389 = vpow.pop %v388
  %vm390 = vcmp.ge.f32.partialorder %v384, 0.0
  %v391 = vadd.f32 %v389, 1.0
  %v392 = vrcp.pop %v391
  %v393 = vmul.f32 %v391, %v392
  %v394 = vsub.f32 1.0, %v393
  %v395 = vmul.f32 %v392, %v394
  %v396 = vadd.f32 %v392, %v395
  %vm397 = vweird.f32 %v391
  %vm398 = vweird.f32 %v392
  %vm399 = vmor %vm397, %vm398
  %v400 = vsel %vm399, %v392, %v396
  %v401 = vand.u32 2147483647, %v391
  %vm402 = vcmp.eq.f32.partialorder %v401, 8.507059e+37
  %v403 = vand.u32 %v391, 2147483648
  %v404 = vor.u32 1.1754944e-38, %v403
  %v405 = vsel %vm402, %v404, %v400
  %v406 = vmul.f32 1.0, %v405
  %v407 = vmul.f32 %v389, %v405
  %v408 = vsel %vm390, %v406, %v407
  %409 = vst [vmem:[%s6] sm:$0x1] %v408
  // Predicated region
  $region26: #{discriminator_forward.1} parent=0 // pred_check
    _
  $region27: #{discriminator_forward.1} parent=0 // pred_check_branch
    %411 = sbr.rel (0) target = $region29
  $region28: #{discriminator_forward.1} parent=0 // pred_region
    _
  $region29: #{discriminator_forward.1} parent=0 // pred_fallthru
    _
  // Predicated region
  $region30: #{discriminator_forward.1} parent=0 // pred_check
    _
  $region31: #{discriminator_forward.1} parent=0 // pred_check_branch
    %413 = sbr.rel (0) target = $region33
  $region32: #{discriminator_forward.1} parent=0 // pred_region
    _
  $region33: #{discriminator_forward.1} parent=0 // pred_fallthru
    _

</llo_original>
